<compile_context>
chip_gen: v6e
topology: v6e:2x2x1
jax: 0.10.0
libtpu: 0.0.40
codegen_flags: <defaults>
</compile_context>

<pallas_src>
import jax
import jax.numpy as jnp
from jax.experimental import pallas as pl
from jax.experimental.pallas import tpu as pltpu

_LANE = 128     # lane (last-dim) granularity
_SUBLANE = 8    # sublane (second-to-last dim) granularity for f32


def _round_up(x, m):
    return ((x + m - 1) // m) * m


def _pad_to(a, shape):
    pads = [(0, t - s) for s, t in zip(a.shape, shape)]
    if all(p == (0, 0) for p in pads):
        return a
    return jnp.pad(a, pads)


def _relu_wn_fc_kernel(g_ref, x_ref, vt_ref, b_ref, o_ref):
    """One (tn, M) output tile of y = ReLU((x @ V^T) * (g / ||V||_F) + b).

    g_ref:  SMEM (1, 1)   scalar gain g
    x_ref:  VMEM (tn, K)  activation tile (K zero-padded to a 128 multiple)
    vt_ref: VMEM (K, M)   V^T (zero-padded), resident across the batch grid
    b_ref:  VMEM (1, M)   bias row (zero-padded)
    o_ref:  VMEM (tn, M)  output tile (M is a 128 multiple -> unmasked stores)
    """
    vt = vt_ref[...]
    # Frobenius norm computed in-kernel from the resident weight (zero padding
    # does not change it).  XLU reduce + EUP rsqrt live in otherwise-free slots.
    vt_f32 = vt.astype(jnp.float32)
    scale = g_ref[0, 0] * jax.lax.rsqrt(jnp.sum(vt_f32 * vt_f32))
    # Native (N, K) @ (K, M) matmul on the MXU with f32 accumulation.
    y = jnp.dot(x_ref[...], vt, preferred_element_type=jnp.float32)
    y = y * scale + b_ref[...].astype(jnp.float32)
    o_ref[...] = jnp.maximum(y, 0.0).astype(o_ref.dtype)


def relu_with_weight_norm_fc(x, weight_v, weight_g, bias, *,
                             block_n=512, use_bf16_matmul=False):
    """ReLU(x @ (g * V / ||V||_F)^T + b) -- PyTorch weight_norm(dim=None) semantics.

    x:        (N, in_dim)
    weight_v: (out_dim, in_dim)   (PyTorch nn.Linear weight layout)
    weight_g: scalar
    bias:     (out_dim,)
    """
    n, in_dim = x.shape
    out_dim, in_dim_w = weight_v.shape
    assert in_dim == in_dim_w
    assert bias.shape == (out_dim,)

    # ---- one-time wrapper-side layout prep (glue, not the hot path) ----
    k_p = _round_up(in_dim, _LANE)     # lane-dense contraction dim
    m_p = _round_up(out_dim, _LANE)    # lane-dense output dim

    tn = min(block_n, _round_up(n, _SUBLANE))
    tn = _round_up(tn, _SUBLANE)
    n_p = _round_up(n, tn)
    num_blocks = n_p // tn

    compute_dtype = jnp.bfloat16 if use_bf16_matmul else x.dtype
    x_p = _pad_to(x, (n_p, k_p)).astype(compute_dtype)
    vt_p = _pad_to(weight_v.T, (k_p, m_p)).astype(compute_dtype)   # (K, M)
    b_p = _pad_to(bias.reshape(1, out_dim).astype(jnp.float32), (1, m_p))
    g2d = jnp.asarray(weight_g, jnp.float32).reshape(1, 1)

    out_shape = jax.ShapeDtypeStruct((n_p, m_p), x.dtype)

    if num_blocks == 1:
        # Single resident block: no grid, whole arrays live in VMEM.
        out_p = pl.pallas_call(
            _relu_wn_fc_kernel,
            out_shape=out_shape,
            in_specs=[
                pl.BlockSpec(memory_space=pltpu.SMEM),   # g (scalar)
                pl.BlockSpec(memory_space=pltpu.VMEM),   # x
                pl.BlockSpec(memory_space=pltpu.VMEM),   # V^T
                pl.BlockSpec(memory_space=pltpu.VMEM),   # bias
            ],
            out_specs=pl.BlockSpec(memory_space=pltpu.VMEM),
        )(g2d, x_p, vt_p, b_p)
    else:
        # Tile the batch axis; weight/bias stay resident (index_map -> (0, 0)),
        # x/out tiles stream with BlockSpec double-buffering.  Batch axis is
        # "parallel" so v7x shards it across its two TensorCores.
        out_p = pl.pallas_call(
            _relu_wn_fc_kernel,
            out_shape=out_shape,
            grid=(num_blocks,),
            in_specs=[
                pl.BlockSpec(memory_space=pltpu.SMEM),            # g (scalar)
                pl.BlockSpec((tn, k_p), lambda i: (i, 0)),        # x tile
                pl.BlockSpec((k_p, m_p), lambda i: (0, 0)),       # V^T resident
                pl.BlockSpec((1, m_p), lambda i: (0, 0)),         # bias resident
            ],
            out_specs=pl.BlockSpec((tn, m_p), lambda i: (i, 0)),
            compiler_params=pltpu.CompilerParams(
                dimension_semantics=("parallel",)),
        )(g2d, x_p, vt_p, b_p)

    return out_p[:n, :out_dim]


if __name__ == "__main__":
    key = jax.random.PRNGKey(0)
    k_x, k_v, k_g, k_b, k_x2 = jax.random.split(key, 5)

    # Small shapes consistent with the module: Linear(in_dim=32, out_dim=64).
    batch, in_dim, out_dim = 8, 32, 64
    x = jax.random.normal(k_x, (batch, in_dim), dtype=jnp.float32)
    weight_v = jax.random.normal(k_v, (out_dim, in_dim), dtype=jnp.float32) * 0.1
    weight_g = jnp.abs(jax.random.normal(k_g, (), dtype=jnp.float32)) + 1.0
    bias = jax.random.normal(k_b, (out_dim,), dtype=jnp.float32) * 0.1

    def ref_fn(x_, v_, g_, b_):
        w = g_ * v_ / jnp.sqrt(jnp.sum(v_ ** 2))
        return jnp.maximum(x_ @ w.T + b_, 0.0)

    # 1) Single-block (no-grid) path.
    out = jax.block_until_ready(
        relu_with_weight_norm_fc(x, weight_v, weight_g, bias))
    ref = ref_fn(x, weight_v, weight_g, bias)
    assert out.shape == (batch, out_dim)
    assert jnp.allclose(out, ref, atol=1e-4, rtol=1e-4), "small-shape mismatch"

    # 2) Batch-tiled path (uneven batch exercises padding + multi-block grid
    #    with the weight resident across grid steps).
    big_batch = 1040
    x2 = jax.random.normal(k_x2, (big_batch, in_dim), dtype=jnp.float32)
    out2 = jax.block_until_ready(
        relu_with_weight_norm_fc(x2, weight_v, weight_g, bias, block_n=512))
    ref2 = ref_fn(x2, weight_v, weight_g, bias)
    assert out2.shape == (big_batch, out_dim)
    assert jnp.allclose(out2, ref2, atol=1e-4, rtol=1e-4), "tiled-shape mismatch"

    print("KERNEL_OK")
</pallas_src>

<mosaic_0001>
module attributes {stable_mosaic.version = 11 : i64} {
  func.func @_relu_wn_fc_kernel(%arg0: memref<1x1xf32, #tpu.memory_space<smem>>, %arg1: memref<8x128xf32, #tpu.memory_space<vmem>>, %arg2: memref<128x128xf32, #tpu.memory_space<vmem>>, %arg3: memref<1x128xf32, #tpu.memory_space<vmem>>, %arg4: memref<8x128xf32, #tpu.memory_space<vmem>>) attributes {dimension_semantics = [], scalar_prefetch = 0 : i64, scratch_operands = 0 : i64, tpu.core_type = #tpu.core_type<tc>} {
    %c0 = arith.constant 0 : index
    %c0_0 = arith.constant 0 : index
    %0 = vector.load %arg2[%c0, %c0_0] : memref<128x128xf32, #tpu.memory_space<vmem>>, vector<128x128xf32>
    %c0_1 = arith.constant 0 : index
    %c0_2 = arith.constant 0 : index
    %1 = memref.load %arg0[%c0_1, %c0_2] : memref<1x1xf32, #tpu.memory_space<smem>>
    %2 = arith.mulf %0, %0 : vector<128x128xf32>
    %3 = vector.shape_cast %2 : vector<128x128xf32> to vector<1x128x128xf32>
    %cst = arith.constant dense<0.000000e+00> : vector<1xf32>
    %4 = vector.multi_reduction <add>, %3, %cst [1, 2] : vector<1x128x128xf32> to vector<1xf32>
    %5 = vector.shape_cast %4 : vector<1xf32> to vector<1x1x1xf32>
    %6 = vector.extract %5[0, 0, 0] : f32 from vector<1x1x1xf32>
    %7 = math.rsqrt %6 : f32
    %8 = arith.mulf %1, %7 : f32
    %c0_3 = arith.constant 0 : index
    %c0_4 = arith.constant 0 : index
    %9 = vector.load %arg1[%c0_3, %c0_4] : memref<8x128xf32, #tpu.memory_space<vmem>>, vector<8x128xf32>
    %cst_5 = arith.constant dense<0.000000e+00> : vector<8x128xf32>
    %10 = tpu.matmul %9, %0, %cst_5 {dimension_numbers = #tpu.dot_dimension_numbers<[1], [0], [0], [1], [0, 0, 1, 1], [], []>} : vector<8x128xf32>, vector<128x128xf32>, vector<8x128xf32> -> vector<8x128xf32>
    %11 = vector.broadcast %8 : f32 to vector<8x128xf32>
    %12 = arith.mulf %10, %11 : vector<8x128xf32>
    %c0_6 = arith.constant 0 : index
    %c0_7 = arith.constant 0 : index
    %13 = vector.load %arg3[%c0_6, %c0_7] : memref<1x128xf32, #tpu.memory_space<vmem>>, vector<1x128xf32>
    %14 = vector.broadcast %13 : vector<1x128xf32> to vector<8x128xf32>
    %15 = arith.addf %12, %14 : vector<8x128xf32>
    %cst_8 = arith.constant 0.000000e+00 : f32
    %16 = vector.broadcast %cst_8 : f32 to vector<8x128xf32>
    %17 = arith.maximumf %15, %16 : vector<8x128xf32>
    %c0_9 = arith.constant 0 : index
    %c0_10 = arith.constant 0 : index
    %18 = vector.load %arg4[%c0_9, %c0_10] : memref<8x128xf32, #tpu.memory_space<vmem>>, vector<8x128xf32>
    tpu.vector_store %arg4[%c0_9, %c0_10], %17 {strides = array<i32>} : memref<8x128xf32, #tpu.memory_space<vmem>>, vector<8x128xf32>,
    return
  }
}

</mosaic_0001>

<llo_original>
// kernel: tpu_custom_call.1
$region0: #{tpu_custom_call.1}
  #allocation0 [shape = 'u32[]', space=smem, size = 0x4, offset = 0x4, fixed_abs, tag = 'smem constant byte address 0x4 - core index']
  #allocation1 [shape = 'u32[144,128]{1,0:T(1,128)}', space=vmem, size = 0x12000, scoped, tag = 'internal scratch']
  #allocation2 [shape = 'f32[1,1]{1,0:T(1,128)S(6)}', space=smem, size = 0x200, scoped, tag = 'scoped memory for tpu_custom_call.1']
  %s0 = inlined_call_operand.<no memory space> [shape: f32[1,1], index: 0, kind: input, shape index: {}]
  %s1 = inlined_call_operand.hbm [shape: f32[8,128], index: 1, kind: input, shape index: {}]
  %s2 = inlined_call_operand.hbm [shape: f32[128,128], index: 2, kind: input, shape index: {}]
  %s3 = inlined_call_operand.vmem [shape: f32[1,128], index: 3, kind: input, shape index: {}]
  %s4 = inlined_call_operand.hbm [shape: f32[8,128], index: 4, kind: output, shape index: {}]
  %s5 = sld [smem:[#allocation0]]
  $region34: #{tpu_custom_call.1} parent=0
    _
  %s7 = ssub.s32 1, %s5
  %s8 = scalar_select 0, %s7, %s5
  %9 = sst [smem:[#allocation2]] %s0
  $region1: #{tpu_custom_call.1} parent=0
    #allocation3 [shape = 'u8[4096]{0}', space=vmem, size = 0x1000, scoped, tag = 'input window, operand 1, single buffered']
    #allocation4 [shape = 's32[1]{0}', space=sflag, size = 0x4, scoped, tag = 'scoped memory for tpu_custom_call.1']
    #allocation5 [shape = 's32[1]{0}', space=sflag, size = 0x4, scoped, tag = 'scoped memory for tpu_custom_call.1']
    #allocation6 [shape = 'u8[65536]{0}', space=vmem, size = 0x10000, scoped, tag = 'input window, operand 2, single buffered']
    #allocation7 [shape = 's32[1]{0}', space=sflag, size = 0x4, scoped, tag = 'scoped memory for tpu_custom_call.1']
    #allocation8 [shape = 'u8[4096]{0}', space=vmem, size = 0x1000, scoped, tag = 'output window, operand 0, single buffered']
    %10 = vsyncpa [#allocation4], 0
    %11 = vsyncpa [#allocation7], 0
    %12 = vsyncpa [#allocation5], 0
    // Predicated region
    $region2: #{tpu_custom_call.1} parent=1 // pred_check
      _
    $region3: #{tpu_custom_call.1} parent=1 // pred_check_branch
      %14 = sbr.rel (0) target = $region5
    $region4: #{tpu_custom_call.1} parent=1 // pred_region
      _
    $region5: #{tpu_custom_call.1} parent=1 // pred_fallthru
      _
    // Predicated region
    $region6: #{tpu_custom_call.1} parent=1 // pred_check
      _
    $region7: #{tpu_custom_call.1} parent=1 // pred_check_branch
      %16 = sbr.rel (0) target = $region9
    $region8: #{tpu_custom_call.1} parent=1 // pred_region
      %s18 = ssub.s32 128, 128
      %19 = vsyncadd [#allocation4], %s18
      %s21 = sshll.u32 [#allocation3], 4
      %s22 = int_to_ptr.vmem [resolvable:$true] %s21
      %24 = dma.hbm_to_vmem [thread:$0]  %s1, 128, %s22, [#allocation4]
    $region9: #{tpu_custom_call.1} parent=1 // pred_fallthru
      _
    // Predicated region
    $region10: #{tpu_custom_call.1} parent=1 // pred_check
      _
    $region11: #{tpu_custom_call.1} parent=1 // pred_check_branch
      %26 = sbr.rel (0) target = $region13
    $region12: #{tpu_custom_call.1} parent=1 // pred_region
      %s28 = ssub.s32 2048, 2048
      %29 = vsyncadd [#allocation7], %s28
      %s30 = sshll.u32 [#allocation6], 4
      %s31 = int_to_ptr.vmem [resolvable:$true] %s30
      %36 = dma.hbm_to_vmem [thread:$0]  %s2, 2048, %s31, [#allocation7], 128, 128, 8
    $region13: #{tpu_custom_call.1} parent=1 // pred_fallthru
      _
    // Predicated region
    $region14: #{tpu_custom_call.1} parent=1 // pred_check
      _
    $region15: #{tpu_custom_call.1} parent=1 // pred_check_branch
      %38 = sbr.rel (0) target = $region17
    $region16: #{tpu_custom_call.1} parent=1 // pred_region
      _
    $region17: #{tpu_custom_call.1} parent=1 // pred_fallthru
      _
    // Predicated region
    $region18: #{tpu_custom_call.1} parent=1 // pred_check
      _
    $region19: #{tpu_custom_call.1} parent=1 // pred_check_branch
      %40 = sbr.rel (0) target = $region21
    $region20: #{tpu_custom_call.1} parent=1 // pred_region
      %41 = dma.done [#allocation4], 128
    $region21: #{tpu_custom_call.1} parent=1 // pred_fallthru
      _
    // Predicated region
    $region22: #{tpu_custom_call.1} parent=1 // pred_check
      _
    $region23: #{tpu_custom_call.1} parent=1 // pred_check_branch
      %43 = sbr.rel (0) target = $region25
    $region24: #{tpu_custom_call.1} parent=1 // pred_region
      %44 = dma.done [#allocation7], 2048
    $region25: #{tpu_custom_call.1} parent=1 // pred_fallthru
      _
    %v45 = vld [vmem:[#allocation6] sm:$0xff]
    %v46 = vld [vmem:[#allocation6 + $0x8] sm:$0xff]
    %v47 = vld [vmem:[#allocation6 + $0x10] sm:$0xff]
    %v48 = vld [vmem:[#allocation6 + $0x18] sm:$0xff]
    %v49 = vld [vmem:[#allocation6 + $0x20] sm:$0xff]
    %v50 = vld [vmem:[#allocation6 + $0x28] sm:$0xff]
    %v51 = vld [vmem:[#allocation6 + $0x30] sm:$0xff]
    %v52 = vld [vmem:[#allocation6 + $0x38] sm:$0xff]
    %v53 = vld [vmem:[#allocation6 + $0x40] sm:$0xff]
    %v54 = vld [vmem:[#allocation6 + $0x48] sm:$0xff]
    %v55 = vld [vmem:[#allocation6 + $0x50] sm:$0xff]
    %v56 = vld [vmem:[#allocation6 + $0x58] sm:$0xff]
    %v57 = vld [vmem:[#allocation6 + $0x60] sm:$0xff]
    %v58 = vld [vmem:[#allocation6 + $0x68] sm:$0xff]
    %v59 = vld [vmem:[#allocation6 + $0x70] sm:$0xff]
    %v60 = vld [vmem:[#allocation6 + $0x78] sm:$0xff]
    %s61 = sld [smem:[#allocation2]]
    %v62 = vmul.f32 %v45, %v45
    %v63 = vmul.f32 %v46, %v46
    %v64 = vmul.f32 %v47, %v47
    %v65 = vmul.f32 %v48, %v48
    %v66 = vmul.f32 %v49, %v49
    %v67 = vmul.f32 %v50, %v50
    %v68 = vmul.f32 %v51, %v51
    %v69 = vmul.f32 %v52, %v52
    %v70 = vmul.f32 %v53, %v53
    %v71 = vmul.f32 %v54, %v54
    %v72 = vmul.f32 %v55, %v55
    %v73 = vmul.f32 %v56, %v56
    %v74 = vmul.f32 %v57, %v57
    %v75 = vmul.f32 %v58, %v58
    %v76 = vmul.f32 %v59, %v59
    %v77 = vmul.f32 %v60, %v60
    %v78 = vadd.f32 %v62, %v63
    %v79 = vadd.f32 %v78, %v64
    %v80 = vadd.f32 %v79, %v65
    %v81 = vadd.f32 %v80, %v66
    %v82 = vadd.f32 %v81, %v67
    %v83 = vadd.f32 %v82, %v68
    %v84 = vadd.f32 %v83, %v69
    %v85 = vadd.f32 %v84, %v70
    %v86 = vadd.f32 %v85, %v71
    %v87 = vadd.f32 %v86, %v72
    %v88 = vadd.f32 %v87, %v73
    %v89 = vadd.f32 %v88, %v74
    %v90 = vadd.f32 %v89, %v75
    %v91 = vadd.f32 %v90, %v76
    %v92 = vadd.f32 %v91, %v77
    %93 = vadd.xlane.f32.xlu0 %v92
    %v94 = vpop.xlane.xlu0 %93
    %v95 = vrot.slane %v94, 4
    %v96 = vadd.f32 %v94, %v95
    %v97 = vrot.slane %v96, 2
    %v98 = vadd.f32 %v96, %v97
    %v99 = vrot.slane %v98, 1
    %v100 = vadd.f32 %v98, %v99
    %s101 = vtos %v100
    %v102 = vstv %s101
    %v103 = vrsqrt.pop %v102
    %s104 = vtos %v103
    %s105 = smul.f32 %s61, %s104
    %v106 = vld [vmem:[#allocation3] sm:$0xff]
    %107 = vmatprep.subr.mxu0 0.0
    %108 = vmatpush1.msra.mxu0 %v60
    %109 = vmatprep.subr.mxu0 0.0
    %110 = vmatpush1.msra.mxu0 %v59
    %111 = vmatprep.subr.mxu0 0.0
    %112 = vmatpush1.msra.mxu0 %v58
    %113 = vmatprep.subr.mxu0 0.0
    %114 = vmatpush1.msra.mxu0 %v57
    %115 = vmatprep.subr.mxu0 0.0
    %116 = vmatpush1.msra.mxu0 %v56
    %117 = vmatprep.subr.mxu0 0.0
    %118 = vmatpush1.msra.mxu0 %v55
    %119 = vmatprep.subr.mxu0 0.0
    %120 = vmatpush1.msra.mxu0 %v54
    %121 = vmatprep.subr.mxu0 0.0
    %122 = vmatpush1.msra.mxu0 %v53
    %123 = vmatprep.subr.mxu0 0.0
    %124 = vmatpush1.msra.mxu0 %v52
    %125 = vmatprep.subr.mxu0 0.0
    %126 = vmatpush1.msra.mxu0 %v51
    %127 = vmatprep.subr.mxu0 0.0
    %128 = vmatpush1.msra.mxu0 %v50
    %129 = vmatprep.subr.mxu0 0.0
    %130 = vmatpush1.msra.mxu0 %v49
    %131 = vmatprep.subr.mxu0 0.0
    %132 = vmatpush1.msra.mxu0 %v48
    %133 = vmatprep.subr.mxu0 0.0
    %134 = vmatpush1.msra.mxu0 %v47
    %135 = vmatprep.subr.mxu0 0.0
    %136 = vmatpush1.msra.mxu0 %v46
    %137 = vmatprep.subr.mxu0 0.0
    %138 = vmatpush1.msra.mxu0 %v45
    %139 = vmatprep.subr.mxu0 0.0
    %140 = vmatpush2.msra.mxu0 0.0
    %141 = vmatprep.subr.mxu0 0.0
    %142 = vmatpush2.msra.mxu0 0.0
    %143 = vmatprep.subr.mxu0 0.0
    %144 = vmatpush2.msra.mxu0 0.0
    %145 = vmatprep.subr.mxu0 0.0
    %146 = vmatpush2.msra.mxu0 0.0
    %147 = vmatprep.subr.mxu0 0.0
    %148 = vmatpush2.msra.mxu0 0.0
    %149 = vmatprep.subr.mxu0 0.0
    %150 = vmatpush2.msra.mxu0 0.0
    %151 = vmatprep.subr.mxu0 0.0
    %152 = vmatpush2.msra.mxu0 0.0
    %153 = vmatprep.subr.mxu0 0.0
    %154 = vmatpush2.msra.mxu0 0.0
    %155 = vmatprep.subr.mxu0 0.0
    %156 = vmatpush2.msra.mxu0 0.0
    %157 = vmatprep.subr.mxu0 0.0
    %158 = vmatpush2.msra.mxu0 0.0
    %159 = vmatprep.subr.mxu0 0.0
    %160 = vmatpush2.msra.mxu0 0.0
    %161 = vmatprep.subr.mxu0 0.0
    %162 = vmatpush2.msra.mxu0 0.0
    %163 = vmatprep.subr.mxu0 0.0
    %164 = vmatpush2.msra.mxu0 0.0
    %165 = vmatprep.subr.mxu0 0.0
    %166 = vmatpush2.msra.mxu0 0.0
    %167 = vmatprep.subr.mxu0 0.0
    %168 = vmatpush2.msra.mxu0 0.0
    %169 = vmatprep.subr.mxu0 0.0
    %170 = vmatpush2.msra.mxu0 0.0
    %171 = vmatprep.mubr.f32.mxu0 0.0
    %172 = vmatmul.mubr.f32.gmra.mxu0 %v106
    %v173 = vpop.f32.mrf.mxu0
    %v174 = vadd.f32 0.0, %v173
    %v175 = vpop.f32.mrf.mxu0
    %176 = vdwg.mxu0
    %v177 = vstv %s105
    %v178 = vmul.f32 %v174, %v177
    %v179 = vld [vmem:[%s3] sm:$0x1]
    %v181 = vlaneseq
    %v182 = vshrl.u32 %v181, 7
    %v183 = vsub.s32 0, %v182
    %v184 = vrot.slane %v179, %v183
    %v186 = vadd.f32 %v178, %v184
    %v187 = vmax.f32 %v186, 0.0
    %188 = vst [vmem:[#allocation8] sm:$0xff] %v187
    // Predicated region
    $region26: #{tpu_custom_call.1} parent=1 // pred_check
      _
    $region27: #{tpu_custom_call.1} parent=1 // pred_check_branch
      %190 = sbr.rel (0) target = $region29
    $region28: #{tpu_custom_call.1} parent=1 // pred_region
      %s192 = ssub.s32 128, 128
      %193 = vsyncadd [#allocation5], %s192
      %s195 = sshll.u32 [#allocation8], 4
      %s196 = int_to_ptr.vmem [resolvable:$true] %s195
      %198 = dma.vmem_to_hbm [thread:$0]  %s196, 128, %s4, [#allocation5]
    $region29: #{tpu_custom_call.1} parent=1 // pred_fallthru
      _
    // Predicated region
    $region30: #{tpu_custom_call.1} parent=1 // pred_check
      _
    $region31: #{tpu_custom_call.1} parent=1 // pred_check_branch
      %200 = sbr.rel (0) target = $region33
    $region32: #{tpu_custom_call.1} parent=1 // pred_region
      %201 = dma.done [#allocation5], 128
    $region33: #{tpu_custom_call.1} parent=1 // pred_fallthru
      _
    %202 = vsyncpa [#allocation4], 1
    %203 = vsyncpa [#allocation7], 1
    %204 = vsyncpa [#allocation5], 1

</llo_original>
